<compile_context>
chip_gen: v6e
topology: v6e:2x2x1
jax: 0.10.0
libtpu: 0.0.40
codegen_flags: <defaults>
</compile_context>

<pallas_src>
import functools
import math

import jax
import jax.numpy as jnp
from jax.experimental import pallas as pl
from jax.experimental.pallas import tpu as pltpu

F1_RAW, F1_PAD = 126, 128      # conv1 out features (padded to lane width)
F2_RAW, F2_PAD = 62, 128       # conv2 out features (padded to lane width)


# ----------------------------------------------------------------------------
# Pallas kernels
# ----------------------------------------------------------------------------
def _gcn_propagate(a_t, x, w, b):
    """relu( D^-1/2 (A+I) D^-1/2 @ (x @ w) + b ), PyG GCNConv semantics.

    a_t is the TRANSPOSED raw adjacency (a_t[dst, src]) without self loops.
    Self-loop add, in-degree and the two diagonal scalings happen here (cheap
    VPU/XLU work hidden under the MXU matmuls), so no normalized O(N^2) matrix
    round-trips through HBM.
    """
    n = a_t.shape[0]
    rows = jax.lax.broadcasted_iota(jnp.int32, (n, n), 0)
    cols = jax.lax.broadcasted_iota(jnp.int32, (n, n), 1)
    a_hat_t = a_t + jnp.where(rows == cols, 1.0, 0.0).astype(jnp.float32)
    deg = jnp.sum(a_hat_t, axis=1, keepdims=True)            # in-degree, (n,1)
    dinv = jnp.where(deg > 0, jax.lax.rsqrt(deg), 0.0)
    h = jnp.dot(x, w, preferred_element_type=jnp.float32)     # X @ W     (MXU)
    z = dinv * jnp.dot(a_hat_t, dinv * h,                     # Ahat^T @ (...)
                       preferred_element_type=jnp.float32) + b
    return jnp.maximum(z, 0.0)


def _gcn_layer1_kernel(a_ref, x_ref, w_ref, b_ref, pw_ref, h_ref, s_ref):
    # conv1 + ReLU + TopKPooling-1 score, all fused.
    h = _gcn_propagate(a_ref[...], x_ref[...], w_ref[...], b_ref[...])
    h_ref[...] = h
    # score = tanh(h @ (w/||w||)); the 1/||w|| is folded into pw on host.
    sc = jnp.tanh(jnp.dot(h, pw_ref[...], preferred_element_type=jnp.float32))
    s_ref[...] = jnp.broadcast_to(sc, s_ref.shape)   # lane-dense score slab


def _gcn_layer2_kernel(a_ref, x_ref, scale_ref, w_ref, b_ref, pw_ref,
                       h_ref, s_ref):
    # (x * pool1-score) + conv2 + ReLU + TopKPooling-2 score, all fused.
    xs = x_ref[...] * scale_ref[...]
    h = _gcn_propagate(a_ref[...], xs, w_ref[...], b_ref[...])
    h_ref[...] = h
    sc = jnp.tanh(jnp.dot(h, pw_ref[...], preferred_element_type=jnp.float32))
    s_ref[...] = jnp.broadcast_to(sc, s_ref.shape)


def _scale_log_softmax_kernel(x_ref, s_ref, o_ref, *, valid):
    # (x * pool2-score) + log_softmax over the first `valid` lanes only.
    z = x_ref[...] * s_ref[...]
    lane = jax.lax.broadcasted_iota(jnp.int32, z.shape, 1)
    z = jnp.where(lane < valid, z, -jnp.inf)          # mask padded lanes
    m = jnp.max(z, axis=1, keepdims=True)
    lse = jnp.log(jnp.sum(jnp.exp(z - m), axis=1, keepdims=True)) + m
    o_ref[...] = z - lse


# ----------------------------------------------------------------------------
# pallas_call wrappers (single full-array block; N=16 fits VMEM comfortably)
# NOTE: for large N, the (N,N)@(N,F) propagate should be row-tiled
# (grid=(N//tm,), dimension_semantics=("parallel",...) for v7x's 2 TCs) with
# an explicit vmem_limit_bytes; at this toy size a single block is optimal.
# ----------------------------------------------------------------------------
def _full_spec(shape):
    return pl.BlockSpec(shape, lambda i: (0,) * len(shape))


_COMPILER_PARAMS = pltpu.CompilerParams(dimension_semantics=("arbitrary",))


def gcn_layer1(a_t, x, w, b, pw):
    n, f = x.shape[0], w.shape[1]
    return pl.pallas_call(
        _gcn_layer1_kernel,
        out_shape=(jax.ShapeDtypeStruct((n, f), jnp.float32),
                   jax.ShapeDtypeStruct((n, f), jnp.float32)),
        grid=(1,),
        in_specs=[_full_spec(t.shape) for t in (a_t, x, w, b, pw)],
        out_specs=(_full_spec((n, f)), _full_spec((n, f))),
        compiler_params=_COMPILER_PARAMS,
    )(a_t, x, w, b, pw)


def gcn_layer2(a_t, x, scale, w, b, pw):
    n, f = x.shape[0], w.shape[1]
    return pl.pallas_call(
        _gcn_layer2_kernel,
        out_shape=(jax.ShapeDtypeStruct((n, f), jnp.float32),
                   jax.ShapeDtypeStruct((n, f), jnp.float32)),
        grid=(1,),
        in_specs=[_full_spec(t.shape) for t in (a_t, x, scale, w, b, pw)],
        out_specs=(_full_spec((n, f)), _full_spec((n, f))),
        compiler_params=_COMPILER_PARAMS,
    )(a_t, x, scale, w, b, pw)


def scale_log_softmax(x, s, valid):
    kern = functools.partial(_scale_log_softmax_kernel, valid=valid)
    return pl.pallas_call(
        kern,
        out_shape=jax.ShapeDtypeStruct(x.shape, jnp.float32),
        grid=(1,),
        in_specs=[_full_spec(x.shape), _full_spec(s.shape)],
        out_specs=_full_spec(x.shape),
        compiler_params=_COMPILER_PARAMS,
    )(x, s)


# ----------------------------------------------------------------------------
# Graph glue (adjacency construction / top-k bookkeeping)
# ----------------------------------------------------------------------------
def dense_adjacency_t(edge_index, n):
    # transposed dense adjacency: A_T[dst, src] += 1 per edge (src, dst)
    a_t = jnp.zeros((n, n), jnp.float32)
    return a_t.at[edge_index[1], edge_index[0]].add(1.0)


def _topk_perm(score_col, ratio):
    k = int(math.ceil(ratio * score_col.shape[0]))
    _, perm = jax.lax.top_k(score_col, k)
    return perm


# ----------------------------------------------------------------------------
# Net4 forward
# ----------------------------------------------------------------------------
def net4_forward(packed, x, edge_index, n_nodes):
    a0_t = dense_adjacency_t(edge_index, n_nodes)

    # --- conv1 + relu + pool1 score (one fused Pallas call) ---
    h1, s1 = gcn_layer1(a0_t, x, packed["w1"], packed["b1"], packed["p1w"])

    # TODO(synk): top-k selection (sort) has no clean Pallas TPU equivalent;
    # the perm row/col gathers below could be moved in-kernel via
    # PrefetchScalarGridSpec + pl.Element but stay in host JAX (tiny here).
    perm1 = _topk_perm(s1[:, 0], 0.5)
    x1, sc1 = h1[perm1], s1[perm1]
    a1_t = a0_t[perm1][:, perm1]                 # filter_adj equivalent

    # --- (scale by score1) + conv2 + relu + pool2 score (one fused call) ---
    h2, s2 = gcn_layer2(a1_t, x1, sc1, packed["w2"], packed["b2"],
                        packed["p2w"])

    perm2 = _topk_perm(s2[:, 0], 0.5)
    x2, sc2 = h2[perm2], s2[perm2]

    # --- (scale by score2) + masked log_softmax (one fused call) ---
    out = scale_log_softmax(x2, sc2, valid=F2_RAW)
    return out[:, :F2_RAW]                       # drop lane padding


net4_forward_jit = jax.jit(net4_forward, static_argnums=(3,))


# ----------------------------------------------------------------------------
# Parameters: init in the module's native shapes, then pad/pack for the kernels
# ----------------------------------------------------------------------------
def init_params(key, num_node_features):
    ks = jax.random.split(key, 8)

    def glorot(k, shape):
        scale = jnp.sqrt(2.0 / (shape[0] + shape[1]))
        return jax.random.normal(k, shape, jnp.float32) * scale

    return {
        "w1": glorot(ks[0], (num_node_features, F1_RAW)),
        "b1": jax.random.normal(ks[1], (F1_RAW,), jnp.float32) * 0.01,
        "w2": glorot(ks[2], (F1_RAW, F2_RAW)),
        "b2": jax.random.normal(ks[3], (F2_RAW,), jnp.float32) * 0.01,
        "pool1_w": jax.random.normal(ks[4], (F1_RAW,), jnp.float32),
        "pool2_w": jax.random.normal(ks[5], (F2_RAW,), jnp.float32),
        # linear1 / linear2 exist in Net4.__init__ but are unused in forward:
        "lin1_w": glorot(ks[6], (768, 11)),
        "lin2_w": glorot(ks[7], (F1_RAW, 11)),
    }


def pack_params(params):
    """Lane-pad to 128 and fold 1/||w|| into the pooling weights (one-time)."""
    f_in = params["w1"].shape[0]
    w1 = jnp.zeros((f_in, F1_PAD), jnp.float32).at[:, :F1_RAW].set(params["w1"])
    b1 = jnp.zeros((1, F1_PAD), jnp.float32).at[0, :F1_RAW].set(params["b1"])
    w2 = jnp.zeros((F1_PAD, F2_PAD), jnp.float32).at[:F1_RAW, :F2_RAW].set(
        params["w2"])
    b2 = jnp.zeros((1, F2_PAD), jnp.float32).at[0, :F2_RAW].set(params["b2"])
    p1 = params["pool1_w"]
    p1w = jnp.zeros((F1_PAD, 1), jnp.float32).at[:F1_RAW, 0].set(
        p1 / jnp.linalg.norm(p1))
    p2 = params["pool2_w"]
    p2w = jnp.zeros((F2_PAD, 1), jnp.float32).at[:F2_RAW, 0].set(
        p2 / jnp.linalg.norm(p2))
    return {"w1": w1, "b1": b1, "w2": w2, "b2": b2, "p1w": p1w, "p2w": p2w}


if __name__ == "__main__":
    key = jax.random.PRNGKey(0)
    N = 16                 # number of graph nodes (small synthetic graph)
    F_IN = 8               # dataset.num_node_features (synthetic)

    # deterministic node features
    k_x, k_p = jax.random.split(key)
    x = jax.random.normal(k_x, (N, F_IN), jnp.float32)

    # deterministic undirected edge set: ring + offset-2 chords (no self-loops)
    i = jnp.arange(N)
    src = jnp.concatenate([i, (i + 1) % N, i, (i + 2) % N])
    dst = jnp.concatenate([(i + 1) % N, i, (i + 2) % N, i])
    edge_index = jnp.stack([src, dst]).astype(jnp.int32)        # (2, 64)

    params = init_params(k_p, F_IN)
    packed = pack_params(params)

    out = net4_forward_jit(packed, x, edge_index, N)
    out = jax.block_until_ready(out)

    assert out.shape == (4, F2_RAW), out.shape
    assert bool(jnp.all(jnp.isfinite(out)))
    # rows of log_softmax should exp-sum to 1
    assert bool(jnp.allclose(jnp.sum(jnp.exp(out), axis=1), 1.0, atol=1e-4))
    print("KERNEL_OK")
</pallas_src>

<mosaic_0001>
module attributes {stable_mosaic.version = 11 : i64} {
  func.func private @main(%arg0: i32) attributes {dimension_semantics = [#tpu.dimension_semantics<core_parallel>], iteration_bounds = array<i64: 2>, tpu.core_type = #tpu.core_type<sc_scalar_subcore>, window_params = []} {
    return
  }
}

module attributes {stable_mosaic.version = 11 : i64} {
  func.func private @main(%arg0: i32) attributes {dimension_semantics = [#tpu.dimension_semantics<core_parallel>], iteration_bounds = array<i64: 2>, tpu.core_type = #tpu.core_type<sc_scalar_subcore>, window_params = []} {
    return
  }
}

module attributes {stable_mosaic.version = 11 : i64} {
  func.func @_gcn_layer1_kernel(%arg0: i32, %arg1: memref<16x16xf32, #tpu.memory_space<vmem>>, %arg2: memref<16x8xf32, #tpu.memory_space<vmem>>, %arg3: memref<8x128xf32, #tpu.memory_space<vmem>>, %arg4: memref<1x128xf32, #tpu.memory_space<vmem>>, %arg5: memref<128x1xf32, #tpu.memory_space<vmem>>, %arg6: memref<16x128xf32, #tpu.memory_space<vmem>>, %arg7: memref<16x128xf32, #tpu.memory_space<vmem>>) attributes {dimension_semantics = [#tpu.dimension_semantics<arbitrary>], iteration_bounds = array<i64: 1>, scalar_prefetch = 0 : i64, scratch_operands = 0 : i64, tpu.core_type = #tpu.core_type<tc>, window_params = [{pipeline_mode = #tpu.pipeline_mode<synchronous>, transform_indices = @transform_0, window_bounds = array<i64: 16, 16>}, {pipeline_mode = #tpu.pipeline_mode<synchronous>, transform_indices = @transform_1, window_bounds = array<i64: 16, 8>}, {pipeline_mode = #tpu.pipeline_mode<synchronous>, transform_indices = @transform_2, window_bounds = array<i64: 8, 128>}, {pipeline_mode = #tpu.pipeline_mode<synchronous>, transform_indices = @transform_3, window_bounds = array<i64: 1, 128>}, {pipeline_mode = #tpu.pipeline_mode<synchronous>, transform_indices = @transform_4, window_bounds = array<i64: 128, 1>}, {pipeline_mode = #tpu.pipeline_mode<synchronous>, transform_indices = @transform_5, window_bounds = array<i64: 16, 128>}, {pipeline_mode = #tpu.pipeline_mode<synchronous>, transform_indices = @transform_6, window_bounds = array<i64: 16, 128>}]} {
    %c0 = arith.constant 0 : index
    %c0_0 = arith.constant 0 : index
    %0 = vector.load %arg1[%c0, %c0_0] : memref<16x16xf32, #tpu.memory_space<vmem>>, vector<16x16xf32>
    %c0_1 = arith.constant 0 : index
    %c0_2 = arith.constant 0 : index
    %1 = vector.load %arg2[%c0_1, %c0_2] : memref<16x8xf32, #tpu.memory_space<vmem>>, vector<16x8xf32>
    %c0_3 = arith.constant 0 : index
    %c0_4 = arith.constant 0 : index
    %2 = vector.load %arg3[%c0_3, %c0_4] : memref<8x128xf32, #tpu.memory_space<vmem>>, vector<8x128xf32>
    %c0_5 = arith.constant 0 : index
    %c0_6 = arith.constant 0 : index
    %3 = vector.load %arg4[%c0_5, %c0_6] : memref<1x128xf32, #tpu.memory_space<vmem>>, vector<1x128xf32>
    %4 = tpu.iota {dimensions = array<i32: 0>} : vector<16x16xi32>
    %5 = tpu.iota {dimensions = array<i32: 1>} : vector<16x16xi32>
    %6 = arith.cmpi eq, %4, %5 : vector<16x16xi32>
    %cst = arith.constant 1.000000e+00 : f32
    %cst_7 = arith.constant 0.000000e+00 : f32
    %7 = vector.broadcast %cst : f32 to vector<16x16xf32>
    %8 = vector.broadcast %cst_7 : f32 to vector<16x16xf32>
    %9 = arith.select %6, %7, %8 : vector<16x16xi1>, vector<16x16xf32>
    %10 = arith.addf %0, %9 : vector<16x16xf32>
    %cst_8 = arith.constant dense<0.000000e+00> : vector<16xf32>
    %11 = vector.multi_reduction <add>, %10, %cst_8 [1] : vector<16x16xf32> to vector<16xf32>
    %12 = vector.shape_cast %11 : vector<16xf32> to vector<16x1xf32>
    %cst_9 = arith.constant 0.000000e+00 : f32
    %13 = vector.broadcast %cst_9 : f32 to vector<16x1xf32>
    %14 = arith.cmpf ogt, %12, %13 : vector<16x1xf32>
    %15 = math.rsqrt %12 : vector<16x1xf32>
    %cst_10 = arith.constant 0.000000e+00 : f32
    %16 = vector.broadcast %cst_10 : f32 to vector<16x1xf32>
    %17 = arith.select %14, %15, %16 : vector<16x1xi1>, vector<16x1xf32>
    %cst_11 = arith.constant dense<0.000000e+00> : vector<16x128xf32>
    %18 = tpu.matmul %1, %2, %cst_11 {dimension_numbers = #tpu.dot_dimension_numbers<[1], [0], [0], [1], [0, 0, 1, 1], [], []>} : vector<16x8xf32>, vector<8x128xf32>, vector<16x128xf32> -> vector<16x128xf32>
    %19 = vector.broadcast %17 : vector<16x1xf32> to vector<16x128xf32>
    %20 = arith.mulf %19, %18 : vector<16x128xf32>
    %cst_12 = arith.constant dense<0.000000e+00> : vector<16x128xf32>
    %21 = tpu.matmul %10, %20, %cst_12 {dimension_numbers = #tpu.dot_dimension_numbers<[1], [0], [0], [1], [0, 0, 1, 1], [], []>} : vector<16x16xf32>, vector<16x128xf32>, vector<16x128xf32> -> vector<16x128xf32>
    %22 = vector.broadcast %17 : vector<16x1xf32> to vector<16x128xf32>
    %23 = arith.mulf %22, %21 : vector<16x128xf32>
    %24 = vector.broadcast %3 : vector<1x128xf32> to vector<16x128xf32>
    %25 = arith.addf %23, %24 : vector<16x128xf32>
    %cst_13 = arith.constant 0.000000e+00 : f32
    %26 = vector.broadcast %cst_13 : f32 to vector<16x128xf32>
    %27 = arith.maximumf %25, %26 : vector<16x128xf32>
    %c0_14 = arith.constant 0 : index
    %c0_15 = arith.constant 0 : index
    %28 = vector.load %arg6[%c0_14, %c0_15] : memref<16x128xf32, #tpu.memory_space<vmem>>, vector<16x128xf32>
    tpu.vector_store %arg6[%c0_14, %c0_15], %27 {strides = array<i32>} : memref<16x128xf32, #tpu.memory_space<vmem>>, vector<16x128xf32>,
    %c0_16 = arith.constant 0 : index
    %c0_17 = arith.constant 0 : index
    %29 = vector.load %arg5[%c0_16, %c0_17] : memref<128x1xf32, #tpu.memory_space<vmem>>, vector<128x1xf32>
    %cst_18 = arith.constant dense<0.000000e+00> : vector<16x1xf32>
    %30 = tpu.matmul %27, %29, %cst_18 {dimension_numbers = #tpu.dot_dimension_numbers<[1], [0], [0], [1], [0, 0, 1, 1], [], []>} : vector<16x128xf32>, vector<128x1xf32>, vector<16x1xf32> -> vector<16x1xf32>
    %31 = math.tanh %30 : vector<16x1xf32>
    %32 = vector.shape_cast %31 : vector<16x1xf32> to vector<16x1xf32>
    %33 = vector.broadcast %32 : vector<16x1xf32> to vector<16x128xf32>
    %c0_19 = arith.constant 0 : index
    %c0_20 = arith.constant 0 : index
    %34 = vector.load %arg7[%c0_19, %c0_20] : memref<16x128xf32, #tpu.memory_space<vmem>>, vector<16x128xf32>
    tpu.vector_store %arg7[%c0_19, %c0_20], %33 {strides = array<i32>} : memref<16x128xf32, #tpu.memory_space<vmem>>, vector<16x128xf32>,
    return
  }
  func.func @transform_0(%arg0: i32) -> (i32, i32) {
    %c0_i32 = arith.constant 0 : i32
    %c0_i32_0 = arith.constant 0 : i32
    %c0_i32_1 = arith.constant 0 : i32
    return %c0_i32, %c0_i32_0 : i32, i32
  }
  func.func @transform_1(%arg0: i32) -> (i32, i32) {
    %c0_i32 = arith.constant 0 : i32
    %c0_i32_0 = arith.constant 0 : i32
    %c0_i32_1 = arith.constant 0 : i32
    return %c0_i32, %c0_i32_0 : i32, i32
  }
  func.func @transform_2(%arg0: i32) -> (i32, i32) {
    %c0_i32 = arith.constant 0 : i32
    %c0_i32_0 = arith.constant 0 : i32
    %c0_i32_1 = arith.constant 0 : i32
    return %c0_i32, %c0_i32_0 : i32, i32
  }
  func.func @transform_3(%arg0: i32) -> (i32, i32) {
    %c0_i32 = arith.constant 0 : i32
    %c0_i32_0 = arith.constant 0 : i32
    %c0_i32_1 = arith.constant 0 : i32
    return %c0_i32, %c0_i32_0 : i32, i32
  }
  func.func @transform_4(%arg0: i32) -> (i32, i32) {
    %c0_i32 = arith.constant 0 : i32
    %c0_i32_0 = arith.constant 0 : i32
    %c0_i32_1 = arith.constant 0 : i32
    return %c0_i32, %c0_i32_0 : i32, i32
  }
  func.func @transform_5(%arg0: i32) -> (i32, i32) {
    %c0_i32 = arith.constant 0 : i32
    %c0_i32_0 = arith.constant 0 : i32
    %c0_i32_1 = arith.constant 0 : i32
    return %c0_i32, %c0_i32_0 : i32, i32
  }
  func.func @transform_6(%arg0: i32) -> (i32, i32) {
    %c0_i32 = arith.constant 0 : i32
    %c0_i32_0 = arith.constant 0 : i32
    %c0_i32_1 = arith.constant 0 : i32
    return %c0_i32, %c0_i32_0 : i32, i32
  }
}

module attributes {stable_mosaic.version = 11 : i64} {
  func.func @_gcn_layer2_kernel(%arg0: i32, %arg1: memref<8x8xf32, #tpu.memory_space<vmem>>, %arg2: memref<8x128xf32, #tpu.memory_space<vmem>>, %arg3: memref<8x128xf32, #tpu.memory_space<vmem>>, %arg4: memref<128x128xf32, #tpu.memory_space<vmem>>, %arg5: memref<1x128xf32, #tpu.memory_space<vmem>>, %arg6: memref<128x1xf32, #tpu.memory_space<vmem>>, %arg7: memref<8x128xf32, #tpu.memory_space<vmem>>, %arg8: memref<8x128xf32, #tpu.memory_space<vmem>>) attributes {dimension_semantics = [#tpu.dimension_semantics<arbitrary>], iteration_bounds = array<i64: 1>, scalar_prefetch = 0 : i64, scratch_operands = 0 : i64, tpu.core_type = #tpu.core_type<tc>, window_params = [{pipeline_mode = #tpu.pipeline_mode<synchronous>, transform_indices = @transform_0, window_bounds = array<i64: 8, 8>}, {pipeline_mode = #tpu.pipeline_mode<synchronous>, transform_indices = @transform_1, window_bounds = array<i64: 8, 128>}, {pipeline_mode = #tpu.pipeline_mode<synchronous>, transform_indices = @transform_2, window_bounds = array<i64: 8, 128>}, {pipeline_mode = #tpu.pipeline_mode<synchronous>, transform_indices = @transform_3, window_bounds = array<i64: 128, 128>}, {pipeline_mode = #tpu.pipeline_mode<synchronous>, transform_indices = @transform_4, window_bounds = array<i64: 1, 128>}, {pipeline_mode = #tpu.pipeline_mode<synchronous>, transform_indices = @transform_5, window_bounds = array<i64: 128, 1>}, {pipeline_mode = #tpu.pipeline_mode<synchronous>, transform_indices = @transform_6, window_bounds = array<i64: 8, 128>}, {pipeline_mode = #tpu.pipeline_mode<synchronous>, transform_indices = @transform_7, window_bounds = array<i64: 8, 128>}]} {
    %c0 = arith.constant 0 : index
    %c0_0 = arith.constant 0 : index
    %0 = vector.load %arg2[%c0, %c0_0] : memref<8x128xf32, #tpu.memory_space<vmem>>, vector<8x128xf32>
    %c0_1 = arith.constant 0 : index
    %c0_2 = arith.constant 0 : index
    %1 = vector.load %arg3[%c0_1, %c0_2] : memref<8x128xf32, #tpu.memory_space<vmem>>, vector<8x128xf32>
    %2 = arith.mulf %0, %1 : vector<8x128xf32>
    %c0_3 = arith.constant 0 : index
    %c0_4 = arith.constant 0 : index
    %3 = vector.load %arg1[%c0_3, %c0_4] : memref<8x8xf32, #tpu.memory_space<vmem>>, vector<8x8xf32>
    %c0_5 = arith.constant 0 : index
    %c0_6 = arith.constant 0 : index
    %4 = vector.load %arg4[%c0_5, %c0_6] : memref<128x128xf32, #tpu.memory_space<vmem>>, vector<128x128xf32>
    %c0_7 = arith.constant 0 : index
    %c0_8 = arith.constant 0 : index
    %5 = vector.load %arg5[%c0_7, %c0_8] : memref<1x128xf32, #tpu.memory_space<vmem>>, vector<1x128xf32>
    %6 = tpu.iota {dimensions = array<i32: 0>} : vector<8x8xi32>
    %7 = tpu.iota {dimensions = array<i32: 1>} : vector<8x8xi32>
    %8 = arith.cmpi eq, %6, %7 : vector<8x8xi32>
    %cst = arith.constant 1.000000e+00 : f32
    %cst_9 = arith.constant 0.000000e+00 : f32
    %9 = vector.broadcast %cst : f32 to vector<8x8xf32>
    %10 = vector.broadcast %cst_9 : f32 to vector<8x8xf32>
    %11 = arith.select %8, %9, %10 : vector<8x8xi1>, vector<8x8xf32>
    %12 = arith.addf %3, %11 : vector<8x8xf32>
    %cst_10 = arith.constant dense<0.000000e+00> : vector<8xf32>
    %13 = vector.multi_reduction <add>, %12, %cst_10 [1] : vector<8x8xf32> to vector<8xf32>
    %14 = vector.shape_cast %13 : vector<8xf32> to vector<8x1xf32>
    %cst_11 = arith.constant 0.000000e+00 : f32
    %15 = vector.broadcast %cst_11 : f32 to vector<8x1xf32>
    %16 = arith.cmpf ogt, %14, %15 : vector<8x1xf32>
    %17 = math.rsqrt %14 : vector<8x1xf32>
    %cst_12 = arith.constant 0.000000e+00 : f32
    %18 = vector.broadcast %cst_12 : f32 to vector<8x1xf32>
    %19 = arith.select %16, %17, %18 : vector<8x1xi1>, vector<8x1xf32>
    %cst_13 = arith.constant dense<0.000000e+00> : vector<8x128xf32>
    %20 = tpu.matmul %2, %4, %cst_13 {dimension_numbers = #tpu.dot_dimension_numbers<[1], [0], [0], [1], [0, 0, 1, 1], [], []>} : vector<8x128xf32>, vector<128x128xf32>, vector<8x128xf32> -> vector<8x128xf32>
    %21 = vector.broadcast %19 : vector<8x1xf32> to vector<8x128xf32>
    %22 = arith.mulf %21, %20 : vector<8x128xf32>
    %cst_14 = arith.constant dense<0.000000e+00> : vector<8x128xf32>
    %23 = tpu.matmul %12, %22, %cst_14 {dimension_numbers = #tpu.dot_dimension_numbers<[1], [0], [0], [1], [0, 0, 1, 1], [], []>} : vector<8x8xf32>, vector<8x128xf32>, vector<8x128xf32> -> vector<8x128xf32>
    %24 = vector.broadcast %19 : vector<8x1xf32> to vector<8x128xf32>
    %25 = arith.mulf %24, %23 : vector<8x128xf32>
    %26 = vector.broadcast %5 : vector<1x128xf32> to vector<8x128xf32>
    %27 = arith.addf %25, %26 : vector<8x128xf32>
    %cst_15 = arith.constant 0.000000e+00 : f32
    %28 = vector.broadcast %cst_15 : f32 to vector<8x128xf32>
    %29 = arith.maximumf %27, %28 : vector<8x128xf32>
    %c0_16 = arith.constant 0 : index
    %c0_17 = arith.constant 0 : index
    %30 = vector.load %arg7[%c0_16, %c0_17] : memref<8x128xf32, #tpu.memory_space<vmem>>, vector<8x128xf32>
    tpu.vector_store %arg7[%c0_16, %c0_17], %29 {strides = array<i32>} : memref<8x128xf32, #tpu.memory_space<vmem>>, vector<8x128xf32>,
    %c0_18 = arith.constant 0 : index
    %c0_19 = arith.constant 0 : index
    %31 = vector.load %arg6[%c0_18, %c0_19] : memref<128x1xf32, #tpu.memory_space<vmem>>, vector<128x1xf32>
    %cst_20 = arith.constant dense<0.000000e+00> : vector<8x1xf32>
    %32 = tpu.matmul %29, %31, %cst_20 {dimension_numbers = #tpu.dot_dimension_numbers<[1], [0], [0], [1], [0, 0, 1, 1], [], []>} : vector<8x128xf32>, vector<128x1xf32>, vector<8x1xf32> -> vector<8x1xf32>
    %33 = math.tanh %32 : vector<8x1xf32>
    %34 = vector.shape_cast %33 : vector<8x1xf32> to vector<8x1xf32>
    %35 = vector.broadcast %34 : vector<8x1xf32> to vector<8x128xf32>
    %c0_21 = arith.constant 0 : index
    %c0_22 = arith.constant 0 : index
    %36 = vector.load %arg8[%c0_21, %c0_22] : memref<8x128xf32, #tpu.memory_space<vmem>>, vector<8x128xf32>
    tpu.vector_store %arg8[%c0_21, %c0_22], %35 {strides = array<i32>} : memref<8x128xf32, #tpu.memory_space<vmem>>, vector<8x128xf32>,
    return
  }
  func.func @transform_0(%arg0: i32) -> (i32, i32) {
    %c0_i32 = arith.constant 0 : i32
    %c0_i32_0 = arith.constant 0 : i32
    %c0_i32_1 = arith.constant 0 : i32
    return %c0_i32, %c0_i32_0 : i32, i32
  }
  func.func @transform_1(%arg0: i32) -> (i32, i32) {
    %c0_i32 = arith.constant 0 : i32
    %c0_i32_0 = arith.constant 0 : i32
    %c0_i32_1 = arith.constant 0 : i32
    return %c0_i32, %c0_i32_0 : i32, i32
  }
  func.func @transform_2(%arg0: i32) -> (i32, i32) {
    %c0_i32 = arith.constant 0 : i32
    %c0_i32_0 = arith.constant 0 : i32
    %c0_i32_1 = arith.constant 0 : i32
    return %c0_i32, %c0_i32_0 : i32, i32
  }
  func.func @transform_3(%arg0: i32) -> (i32, i32) {
    %c0_i32 = arith.constant 0 : i32
    %c0_i32_0 = arith.constant 0 : i32
    %c0_i32_1 = arith.constant 0 : i32
    return %c0_i32, %c0_i32_0 : i32, i32
  }
  func.func @transform_4(%arg0: i32) -> (i32, i32) {
    %c0_i32 = arith.constant 0 : i32
    %c0_i32_0 = arith.constant 0 : i32
    %c0_i32_1 = arith.constant 0 : i32
    return %c0_i32, %c0_i32_0 : i32, i32
  }
  func.func @transform_5(%arg0: i32) -> (i32, i32) {
    %c0_i32 = arith.constant 0 : i32
    %c0_i32_0 = arith.constant 0 : i32
    %c0_i32_1 = arith.constant 0 : i32
    return %c0_i32, %c0_i32_0 : i32, i32
  }
  func.func @transform_6(%arg0: i32) -> (i32, i32) {
    %c0_i32 = arith.constant 0 : i32
    %c0_i32_0 = arith.constant 0 : i32
    %c0_i32_1 = arith.constant 0 : i32
    return %c0_i32, %c0_i32_0 : i32, i32
  }
  func.func @transform_7(%arg0: i32) -> (i32, i32) {
    %c0_i32 = arith.constant 0 : i32
    %c0_i32_0 = arith.constant 0 : i32
    %c0_i32_1 = arith.constant 0 : i32
    return %c0_i32, %c0_i32_0 : i32, i32
  }
}

module attributes {stable_mosaic.version = 11 : i64} {
  func.func @_scale_log_softmax_kernel(%arg0: i32, %arg1: memref<4x128xf32, #tpu.memory_space<vmem>>, %arg2: memref<4x128xf32, #tpu.memory_space<vmem>>, %arg3: memref<4x128xf32, #tpu.memory_space<vmem>>) attributes {dimension_semantics = [#tpu.dimension_semantics<arbitrary>], iteration_bounds = array<i64: 1>, scalar_prefetch = 0 : i64, scratch_operands = 0 : i64, tpu.core_type = #tpu.core_type<tc>, window_params = [{pipeline_mode = #tpu.pipeline_mode<synchronous>, transform_indices = @transform_0, window_bounds = array<i64: 4, 128>}, {pipeline_mode = #tpu.pipeline_mode<synchronous>, transform_indices = @transform_1, window_bounds = array<i64: 4, 128>}, {pipeline_mode = #tpu.pipeline_mode<synchronous>, transform_indices = @transform_2, window_bounds = array<i64: 4, 128>}]} {
    %c0 = arith.constant 0 : index
    %c0_0 = arith.constant 0 : index
    %0 = vector.load %arg1[%c0, %c0_0] : memref<4x128xf32, #tpu.memory_space<vmem>>, vector<4x128xf32>
    %c0_1 = arith.constant 0 : index
    %c0_2 = arith.constant 0 : index
    %1 = vector.load %arg2[%c0_1, %c0_2] : memref<4x128xf32, #tpu.memory_space<vmem>>, vector<4x128xf32>
    %2 = arith.mulf %0, %1 : vector<4x128xf32>
    %3 = tpu.iota {dimensions = array<i32: 1>} : vector<4x128xi32>
    %c62_i32 = arith.constant 62 : i32
    %4 = vector.broadcast %c62_i32 : i32 to vector<4x128xi32>
    %5 = arith.cmpi slt, %3, %4 : vector<4x128xi32>
    %cst = arith.constant 0xFF800000 : f32
    %6 = vector.broadcast %cst : f32 to vector<4x128xf32>
    %7 = arith.select %5, %2, %6 : vector<4x128xi1>, vector<4x128xf32>
    %cst_3 = arith.constant dense<0xFF800000> : vector<4xf32>
    %8 = vector.multi_reduction <maximumf>, %7, %cst_3 [1] : vector<4x128xf32> to vector<4xf32>
    %9 = vector.shape_cast %8 : vector<4xf32> to vector<4x1xf32>
    %10 = vector.broadcast %9 : vector<4x1xf32> to vector<4x128xf32>
    %11 = arith.subf %7, %10 : vector<4x128xf32>
    %12 = math.exp %11 : vector<4x128xf32>
    %cst_4 = arith.constant dense<0.000000e+00> : vector<4xf32>
    %13 = vector.multi_reduction <add>, %12, %cst_4 [1] : vector<4x128xf32> to vector<4xf32>
    %14 = vector.shape_cast %13 : vector<4xf32> to vector<4x1xf32>
    %15 = math.log %14 : vector<4x1xf32>
    %16 = arith.addf %15, %9 : vector<4x1xf32>
    %17 = vector.broadcast %16 : vector<4x1xf32> to vector<4x128xf32>
    %18 = arith.subf %7, %17 : vector<4x128xf32>
    %c0_5 = arith.constant 0 : index
    %c0_6 = arith.constant 0 : index
    %19 = vector.load %arg3[%c0_5, %c0_6] : memref<4x128xf32, #tpu.memory_space<vmem>>, vector<4x128xf32>
    tpu.vector_store %arg3[%c0_5, %c0_6], %18 {strides = array<i32>} : memref<4x128xf32, #tpu.memory_space<vmem>>, vector<4x128xf32>,
    return
  }
  func.func @transform_0(%arg0: i32) -> (i32, i32) {
    %c0_i32 = arith.constant 0 : i32
    %c0_i32_0 = arith.constant 0 : i32
    %c0_i32_1 = arith.constant 0 : i32
    return %c0_i32, %c0_i32_0 : i32, i32
  }
  func.func @transform_1(%arg0: i32) -> (i32, i32) {
    %c0_i32 = arith.constant 0 : i32
    %c0_i32_0 = arith.constant 0 : i32
    %c0_i32_1 = arith.constant 0 : i32
    return %c0_i32, %c0_i32_0 : i32, i32
  }
  func.func @transform_2(%arg0: i32) -> (i32, i32) {
    %c0_i32 = arith.constant 0 : i32
    %c0_i32_0 = arith.constant 0 : i32
    %c0_i32_1 = arith.constant 0 : i32
    return %c0_i32, %c0_i32_0 : i32, i32
  }
}

</mosaic_0001>

<llo_original>
// kernel: net4_forward.3
$region0: #{net4_forward.3}
  #allocation0 [shape = 'u32[]', space=smem, size = 0x4, offset = 0x4, fixed_abs, tag = 'smem constant byte address 0x4 - core index']
  #allocation1 [shape = 'u32[144,128]{1,0:T(1,128)}', space=vmem, size = 0x12000, scoped, tag = 'internal scratch']
  %s0 = inlined_call_operand.hbm [shape: f32[16,16], index: 0, kind: input, shape index: {}]
  %s1 = inlined_call_operand.vmem [shape: f32[16,8], index: 1, kind: input, shape index: {}]
  %s2 = inlined_call_operand.vmem [shape: f32[8,128], index: 2, kind: input, shape index: {}]
  %s3 = inlined_call_operand.vmem [shape: f32[1,128], index: 3, kind: input, shape index: {}]
  %s4 = inlined_call_operand.vmem [shape: f32[128,1], index: 4, kind: input, shape index: {}]
  %s5 = inlined_call_operand.vmem [shape: f32[16,128], index: 5, kind: output, shape index: {0}]
  %s6 = inlined_call_operand.vmem [shape: f32[16,128], index: 6, kind: output, shape index: {1}]
  %7 = xla_tuple %s5, %s6
  %s8 = sld [smem:[#allocation0]]
  $region42: #{net4_forward.3} parent=0
    _
  %s10 = ssub.s32 1, %s8
  %s11 = scalar_select 0, %s10, %s8
  $region1: #{net4_forward.3} parent=0
    #allocation2 [shape = 'u8[8192]{0}', space=vmem, size = 0x2000, scoped, tag = 'input window, operand 0, single buffered']
    #allocation3 [shape = 's32[1]{0}', space=sflag, size = 0x4, scoped, tag = 'scoped memory for net4_forward.3']
    %12 = vsyncpa [#allocation3], 0
    // Predicated region
    $region2: #{net4_forward.3} parent=1 // pred_check
      _
    $region3: #{net4_forward.3} parent=1 // pred_check_branch
      %14 = sbr.rel (0) target = $region5
    $region4: #{net4_forward.3} parent=1 // pred_region
      %s16 = ssub.s32 256, 256
      %17 = vsyncadd [#allocation3], %s16
      %s18 = sshll.u32 [#allocation2], 4
      %s19 = int_to_ptr.vmem [resolvable:$true] %s18
      %24 = dma.hbm_to_vmem [thread:$0]  %s0, 256, %s19, [#allocation3], 128, 128, 8
    $region5: #{net4_forward.3} parent=1 // pred_fallthru
      _
    // Predicated region
    $region6: #{net4_forward.3} parent=1 // pred_check
      _
    $region7: #{net4_forward.3} parent=1 // pred_check_branch
      %26 = sbr.rel (0) target = $region9
    $region8: #{net4_forward.3} parent=1 // pred_region
      _
    $region9: #{net4_forward.3} parent=1 // pred_fallthru
      _
    // Predicated region
    $region10: #{net4_forward.3} parent=1 // pred_check
      _
    $region11: #{net4_forward.3} parent=1 // pred_check_branch
      %28 = sbr.rel (0) target = $region13
    $region12: #{net4_forward.3} parent=1 // pred_region
      _
    $region13: #{net4_forward.3} parent=1 // pred_fallthru
      _
    // Predicated region
    $region14: #{net4_forward.3} parent=1 // pred_check
      _
    $region15: #{net4_forward.3} parent=1 // pred_check_branch
      %30 = sbr.rel (0) target = $region17
    $region16: #{net4_forward.3} parent=1 // pred_region
      _
    $region17: #{net4_forward.3} parent=1 // pred_fallthru
      _
    // Predicated region
    $region18: #{net4_forward.3} parent=1 // pred_check
      _
    $region19: #{net4_forward.3} parent=1 // pred_check_branch
      %32 = sbr.rel (0) target = $region21
    $region20: #{net4_forward.3} parent=1 // pred_region
      _
    $region21: #{net4_forward.3} parent=1 // pred_fallthru
      _
    // Predicated region
    $region22: #{net4_forward.3} parent=1 // pred_check
      _
    $region23: #{net4_forward.3} parent=1 // pred_check_branch
      %34 = sbr.rel (0) target = $region25
    $region24: #{net4_forward.3} parent=1 // pred_region
      %35 = dma.done [#allocation3], 256
    $region25: #{net4_forward.3} parent=1 // pred_fallthru
      _
    %v36 = vld [vmem:[#allocation2] sm:$0xff]
    %v37 = vld [vmem:[#allocation2 + $0x8] sm:$0xff]
    %v38 = vld [vmem:[%s1] sm:$0xff]
    %v39 = vld [vmem:[%s1 + $0x8] sm:$0xff]
    %v40 = vld [vmem:[%s2] sm:$0xff]
    %v41 = vld [vmem:[%s3] sm:$0x1]
    %v42 = vlaneseq
    %v43 = vshrl.u32 %v42, 7
    %v44 = vadd.s32 %v43, 8
    %v45 = vlaneseq
    %v46 = vand.u32 %v45, 127
    %vm47 = vcmp.eq.s32.totalorder %v43, %v46
    %vm48 = vcmp.eq.s32.totalorder %v44, %v46
    %v49 = vsel %vm47, 1.0, 0.0
    %v50 = vsel %vm48, 1.0, 0.0
    %v51 = vadd.f32 %v36, %v49
    %v52 = vadd.f32 %v37, %v50
    %vm53 = vcmask 130048
    %v54 = vsel %vm53, %v51, 0.0
    %55 = vadd.xlane.f32.xlu0 %v54
    %v56 = vpop.xlane.xlu0 %55
    %v57 = vsel %vm53, %v52, 0.0
    %58 = vadd.xlane.f32.xlu0 %v57
    %v59 = vpop.xlane.xlu0 %58
    %vm60 = vcmp.gt.f32.partialorder %v56, 0.0
    %vm61 = vcmp.gt.f32.partialorder %v59, 0.0
    %v62 = vrsqrt.pop %v56
    %v63 = vrsqrt.pop %v59
    %v64 = vsel %vm60, %v62, 0.0
    %v65 = vsel %vm61, %v63, 0.0
    %vm66 = vcmask 64512
    %v68 = vsel %vm66, %v38, 0
    %v71 = vsel %vm66, %v39, 0
    %73 = vmatprep.subr.mxu0 0.0
    %74 = vmatpush1.msra.mxu0 0.0
    %75 = vmatprep.subr.mxu0 0.0
    %76 = vmatpush1.msra.mxu0 0.0
    %77 = vmatprep.subr.mxu0 0.0
    %78 = vmatpush1.msra.mxu0 0.0
    %79 = vmatprep.subr.mxu0 0.0
    %80 = vmatpush1.msra.mxu0 0.0
    %81 = vmatprep.subr.mxu0 0.0
    %82 = vmatpush1.msra.mxu0 0.0
    %83 = vmatprep.subr.mxu0 0.0
    %84 = vmatpush1.msra.mxu0 0.0
    %85 = vmatprep.subr.mxu0 0.0
    %86 = vmatpush1.msra.mxu0 0.0
    %87 = vmatprep.subr.mxu0 0.0
    %88 = vmatpush1.msra.mxu0 0.0
    %89 = vmatprep.subr.mxu0 0.0
    %90 = vmatpush1.msra.mxu0 0.0
    %91 = vmatprep.subr.mxu0 0.0
    %92 = vmatpush1.msra.mxu0 0.0
    %93 = vmatprep.subr.mxu0 0.0
    %94 = vmatpush1.msra.mxu0 0.0
    %95 = vmatprep.subr.mxu0 0.0
    %96 = vmatpush1.msra.mxu0 0.0
    %97 = vmatprep.subr.mxu0 0.0
    %98 = vmatpush1.msra.mxu0 0.0
    %99 = vmatprep.subr.mxu0 0.0
    %100 = vmatpush1.msra.mxu0 0.0
    %101 = vmatprep.subr.mxu0 0.0
    %102 = vmatpush1.msra.mxu0 0.0
    %103 = vmatprep.subr.mxu0 0.0
    %104 = vmatpush1.msra.mxu0 %v40
    %105 = vmatprep.subr.mxu0 0.0
    %106 = vmatpush2.msra.mxu0 0.0
    %107 = vmatprep.subr.mxu0 0.0
    %108 = vmatpush2.msra.mxu0 0.0
    %109 = vmatprep.subr.mxu0 0.0
    %110 = vmatpush2.msra.mxu0 0.0
    %111 = vmatprep.subr.mxu0 0.0
    %112 = vmatpush2.msra.mxu0 0.0
    %113 = vmatprep.subr.mxu0 0.0
    %114 = vmatpush2.msra.mxu0 0.0
    %115 = vmatprep.subr.mxu0 0.0
    %116 = vmatpush2.msra.mxu0 0.0
    %117 = vmatprep.subr.mxu0 0.0
    %118 = vmatpush2.msra.mxu0 0.0
    %119 = vmatprep.subr.mxu0 0.0
    %120 = vmatpush2.msra.mxu0 0.0
    %121 = vmatprep.subr.mxu0 0.0
    %122 = vmatpush2.msra.mxu0 0.0
    %123 = vmatprep.subr.mxu0 0.0
    %124 = vmatpush2.msra.mxu0 0.0
    %125 = vmatprep.subr.mxu0 0.0
    %126 = vmatpush2.msra.mxu0 0.0
    %127 = vmatprep.subr.mxu0 0.0
    %128 = vmatpush2.msra.mxu0 0.0
    %129 = vmatprep.subr.mxu0 0.0
    %130 = vmatpush2.msra.mxu0 0.0
    %131 = vmatprep.subr.mxu0 0.0
    %132 = vmatpush2.msra.mxu0 0.0
    %133 = vmatprep.subr.mxu0 0.0
    %134 = vmatpush2.msra.mxu0 0.0
    %135 = vmatprep.subr.mxu0 0.0
    %136 = vmatpush2.msra.mxu0 0.0
    %137 = vmatprep.mubr.f32.mxu0 0.0
    %138 = vmatmul.mubr.f32.gmra.mxu0 %v68
    %v139 = vpop.f32.mrf.mxu0
    %v140 = vadd.f32 0.0, %v139
    %v141 = vpop.f32.mrf.mxu0
    %142 = vmatprep.mubr.f32.mxu0 0.0
    %143 = vmatmul.mubr.f32.gmra.mxu0 %v71
    %v144 = vpop.f32.mrf.mxu0
    %v145 = vadd.f32 0.0, %v144
    %v146 = vpop.f32.mrf.mxu0
    %147 = vdwg.mxu0
    %v148 = vmul.f32 %v64, %v140
    %v149 = vmul.f32 %v65, %v145
    %v151 = vsel %vm53, %v51, 0
    %v154 = vsel %vm53, %v52, 0
    %156 = vmatprep.subr.mxu0 0.0
    %157 = vmatpush1.msra.mxu0 0.0
    %158 = vmatprep.subr.mxu0 0.0
    %159 = vmatpush1.msra.mxu0 0.0
    %160 = vmatprep.subr.mxu0 0.0
    %161 = vmatpush1.msra.mxu0 0.0
    %162 = vmatprep.subr.mxu0 0.0
    %163 = vmatpush1.msra.mxu0 0.0
    %164 = vmatprep.subr.mxu0 0.0
    %165 = vmatpush1.msra.mxu0 0.0
    %166 = vmatprep.subr.mxu0 0.0
    %167 = vmatpush1.msra.mxu0 0.0
    %168 = vmatprep.subr.mxu0 0.0
    %169 = vmatpush1.msra.mxu0 0.0
    %170 = vmatprep.subr.mxu0 0.0
    %171 = vmatpush1.msra.mxu0 0.0
    %172 = vmatprep.subr.mxu0 0.0
    %173 = vmatpush1.msra.mxu0 0.0
    %174 = vmatprep.subr.mxu0 0.0
    %175 = vmatpush1.msra.mxu0 0.0
    %176 = vmatprep.subr.mxu0 0.0
    %177 = vmatpush1.msra.mxu0 0.0
    %178 = vmatprep.subr.mxu0 0.0
    %179 = vmatpush1.msra.mxu0 0.0
    %180 = vmatprep.subr.mxu0 0.0
    %181 = vmatpush1.msra.mxu0 0.0
    %182 = vmatprep.subr.mxu0 0.0
    %183 = vmatpush1.msra.mxu0 0.0
    %184 = vmatprep.subr.mxu0 0.0
    %185 = vmatpush1.msra.mxu0 %v149
    %186 = vmatprep.subr.mxu0 0.0
    %187 = vmatpush1.msra.mxu0 %v148
    %188 = vmatprep.subr.mxu0 0.0
    %189 = vmatpush2.msra.mxu0 0.0
    %190 = vmatprep.subr.mxu0 0.0
    %191 = vmatpush2.msra.mxu0 0.0
    %192 = vmatprep.subr.mxu0 0.0
    %193 = vmatpush2.msra.mxu0 0.0
    %194 = vmatprep.subr.mxu0 0.0
    %195 = vmatpush2.msra.mxu0 0.0
    %196 = vmatprep.subr.mxu0 0.0
    %197 = vmatpush2.msra.mxu0 0.0
    %198 = vmatprep.subr.mxu0 0.0
    %199 = vmatpush2.msra.mxu0 0.0
    %200 = vmatprep.subr.mxu0 0.0
    %201 = vmatpush2.msra.mxu0 0.0
    %202 = vmatprep.subr.mxu0 0.0
    %203 = vmatpush2.msra.mxu0 0.0
    %204 = vmatprep.subr.mxu0 0.0
    %205 = vmatpush2.msra.mxu0 0.0
    %206 = vmatprep.subr.mxu0 0.0
    %207 = vmatpush2.msra.mxu0 0.0
    %208 = vmatprep.subr.mxu0 0.0
    %209 = vmatpush2.msra.mxu0 0.0
    %210 = vmatprep.subr.mxu0 0.0
    %211 = vmatpush2.msra.mxu0 0.0
    %212 = vmatprep.subr.mxu0 0.0
    %213 = vmatpush2.msra.mxu0 0.0
    %214 = vmatprep.subr.mxu0 0.0
    %215 = vmatpush2.msra.mxu0 0.0
    %216 = vmatprep.subr.mxu0 0.0
    %217 = vmatpush2.msra.mxu0 0.0
    %218 = vmatprep.subr.mxu0 0.0
    %219 = vmatpush2.msra.mxu0 0.0
    %220 = vmatprep.mubr.f32.mxu0 0.0
    %221 = vmatmul.mubr.f32.gmra.mxu0 %v151
    %v222 = vpop.f32.mrf.mxu0
    %v223 = vadd.f32 0.0, %v222
    %v224 = vpop.f32.mrf.mxu0
    %225 = vmatprep.mubr.f32.mxu0 0.0
    %226 = vmatmul.mubr.f32.gmra.mxu0 %v154
    %v227 = vpop.f32.mrf.mxu0
    %v228 = vadd.f32 0.0, %v227
    %v229 = vpop.f32.mrf.mxu0
    %230 = vdwg.mxu0
    %v231 = vmul.f32 %v64, %v223
    %v232 = vmul.f32 %v65, %v228
    %v234 = vlaneseq
    %v235 = vshrl.u32 %v234, 7
    %v236 = vsub.s32 0, %v235
    %v237 = vrot.slane %v41, %v236
    %v239 = vadd.f32 %v231, %v237
    %v240 = vadd.f32 %v232, %v237
    %v241 = vmax.f32 %v239, 0.0
    %v242 = vmax.f32 %v240, 0.0
    %243 = vst [vmem:[%s5] sm:$0xff] %v241
    %244 = vst [vmem:[%s5 + $0x8] sm:$0xff] %v242
    %v245 = vld [vmem:[%s4] sm:$0xff]
    %v246 = vld [vmem:[%s4 + $0x8] sm:$0xff]
    %v247 = vld [vmem:[%s4 + $0x10] sm:$0xff]
    %v248 = vld [vmem:[%s4 + $0x18] sm:$0xff]
    %v249 = vld [vmem:[%s4 + $0x20] sm:$0xff]
    %v250 = vld [vmem:[%s4 + $0x28] sm:$0xff]
    %v251 = vld [vmem:[%s4 + $0x30] sm:$0xff]
    %v252 = vld [vmem:[%s4 + $0x38] sm:$0xff]
    %v253 = vld [vmem:[%s4 + $0x40] sm:$0xff]
    %v254 = vld [vmem:[%s4 + $0x48] sm:$0xff]
    %v255 = vld [vmem:[%s4 + $0x50] sm:$0xff]
    %v256 = vld [vmem:[%s4 + $0x58] sm:$0xff]
    %v257 = vld [vmem:[%s4 + $0x60] sm:$0xff]
    %v258 = vld [vmem:[%s4 + $0x68] sm:$0xff]
    %v259 = vld [vmem:[%s4 + $0x70] sm:$0xff]
    %v260 = vld [vmem:[%s4 + $0x78] sm:$0xff]
    %261 = vmatprep.subr.mxu0 0.0
    %262 = vmatpush1.msra.mxu0 %v260
    %263 = vmatprep.subr.mxu0 0.0
    %264 = vmatpush1.msra.mxu0 %v259
    %265 = vmatprep.subr.mxu0 0.0
    %266 = vmatpush1.msra.mxu0 %v258
    %267 = vmatprep.subr.mxu0 0.0
    %268 = vmatpush1.msra.mxu0 %v257
    %269 = vmatprep.subr.mxu0 0.0
    %270 = vmatpush1.msra.mxu0 %v256
    %271 = vmatprep.subr.mxu0 0.0
    %272 = vmatpush1.msra.mxu0 %v255
    %273 = vmatprep.subr.mxu0 0.0
    %274 = vmatpush1.msra.mxu0 %v254
    %275 = vmatprep.subr.mxu0 0.0
    %276 = vmatpush1.msra.mxu0 %v253
    %277 = vmatprep.subr.mxu0 0.0
    %278 = vmatpush1.msra.mxu0 %v252
    %279 = vmatprep.subr.mxu0 0.0
    %280 = vmatpush1.msra.mxu0 %v251
    %281 = vmatprep.subr.mxu0 0.0
    %282 = vmatpush1.msra.mxu0 %v250
    %283 = vmatprep.subr.mxu0 0.0
    %284 = vmatpush1.msra.mxu0 %v249
    %285 = vmatprep.subr.mxu0 0.0
    %286 = vmatpush1.msra.mxu0 %v248
    %287 = vmatprep.subr.mxu0 0.0
    %288 = vmatpush1.msra.mxu0 %v247
    %289 = vmatprep.subr.mxu0 0.0
    %290 = vmatpush1.msra.mxu0 %v246
    %291 = vmatprep.subr.mxu0 0.0
    %292 = vmatpush1.msra.mxu0 %v245
    %293 = vmatprep.subr.mxu0 0.0
    %294 = vmatpush2.msra.mxu0 0.0
    %295 = vmatprep.subr.mxu0 0.0
    %296 = vmatpush2.msra.mxu0 0.0
    %297 = vmatprep.subr.mxu0 0.0
    %298 = vmatpush2.msra.mxu0 0.0
    %299 = vmatprep.subr.mxu0 0.0
    %300 = vmatpush2.msra.mxu0 0.0
    %301 = vmatprep.subr.mxu0 0.0
    %302 = vmatpush2.msra.mxu0 0.0
    %303 = vmatprep.subr.mxu0 0.0
    %304 = vmatpush2.msra.mxu0 0.0
    %305 = vmatprep.subr.mxu0 0.0
    %306 = vmatpush2.msra.mxu0 0.0
    %307 = vmatprep.subr.mxu0 0.0
    %308 = vmatpush2.msra.mxu0 0.0
    %309 = vmatprep.subr.mxu0 0.0
    %310 = vmatpush2.msra.mxu0 0.0
    %311 = vmatprep.subr.mxu0 0.0
    %312 = vmatpush2.msra.mxu0 0.0
    %313 = vmatprep.subr.mxu0 0.0
    %314 = vmatpush2.msra.mxu0 0.0
    %315 = vmatprep.subr.mxu0 0.0
    %316 = vmatpush2.msra.mxu0 0.0
    %317 = vmatprep.subr.mxu0 0.0
    %318 = vmatpush2.msra.mxu0 0.0
    %319 = vmatprep.subr.mxu0 0.0
    %320 = vmatpush2.msra.mxu0 0.0
    %321 = vmatprep.subr.mxu0 0.0
    %322 = vmatpush2.msra.mxu0 0.0
    %323 = vmatprep.subr.mxu0 0.0
    %324 = vmatpush2.msra.mxu0 0.0
    %325 = vmatprep.mubr.f32.mxu0 0.0
    %326 = vmatmul.mubr.f32.gmra.mxu0 %v241
    %v327 = vpop.f32.mrf.mxu0
    %v328 = vadd.f32 0.0, %v327
    %v329 = vpop.f32.mrf.mxu0
    %330 = vmatprep.mubr.f32.mxu0 0.0
    %331 = vmatmul.mubr.f32.gmra.mxu0 %v242
    %v332 = vpop.f32.mrf.mxu0
    %v333 = vadd.f32 0.0, %v332
    %v334 = vpop.f32.mrf.mxu0
    %335 = vdwg.mxu0
    %v336 = vtanh.pop %v328
    %v337 = vtanh.pop %v333
    %339 = vset.pattern.permute.xlu0 0
    %340 = vperm.xlu0 %339, %v336
    %v341 = vpop.permute.xlu0 %340
    %344 = vset.pattern.permute.xlu0 0
    %345 = vperm.xlu0 %344, %v337
    %v346 = vpop.permute.xlu0 %345
    %348 = vst [vmem:[%s6] sm:$0xff] %v341
    %349 = vst [vmem:[%s6 + $0x8] sm:$0xff] %v346
    // Predicated region
    $region26: #{net4_forward.3} parent=1 // pred_check
      _
    $region27: #{net4_forward.3} parent=1 // pred_check_branch
      %351 = sbr.rel (0) target = $region29
    $region28: #{net4_forward.3} parent=1 // pred_region
      _
    $region29: #{net4_forward.3} parent=1 // pred_fallthru
      _
    // Predicated region
    $region30: #{net4_forward.3} parent=1 // pred_check
      _
    $region31: #{net4_forward.3} parent=1 // pred_check_branch
      %353 = sbr.rel (0) target = $region33
    $region32: #{net4_forward.3} parent=1 // pred_region
      _
    $region33: #{net4_forward.3} parent=1 // pred_fallthru
      _
    // Predicated region
    $region34: #{net4_forward.3} parent=1 // pred_check
      _
    $region35: #{net4_forward.3} parent=1 // pred_check_branch
      %355 = sbr.rel (0) target = $region37
    $region36: #{net4_forward.3} parent=1 // pred_region
      _
    $region37: #{net4_forward.3} parent=1 // pred_fallthru
      _
    // Predicated region
    $region38: #{net4_forward.3} parent=1 // pred_check
      _
    $region39: #{net4_forward.3} parent=1 // pred_check_branch
      %357 = sbr.rel (0) target = $region41
    $region40: #{net4_forward.3} parent=1 // pred_region
      _
    $region41: #{net4_forward.3} parent=1 // pred_fallthru
      _
    %358 = vsyncpa [#allocation3], 1

// kernel: net4_forward.4
$region0: #{net4_forward.4}
  #allocation0 [shape = 'u32[]', space=smem, size = 0x4, offset = 0x4, fixed_abs, tag = 'smem constant byte address 0x4 - core index']
  #allocation1 [shape = 'u32[144,128]{1,0:T(1,128)}', space=vmem, size = 0x12000, scoped, tag = 'internal scratch']
  %s0 = inlined_call_operand.vmem [shape: f32[8,8], index: 0, kind: input, shape index: {}]
  %s1 = inlined_call_operand.vmem [shape: f32[8,128], index: 1, kind: input, shape index: {}]
  %s2 = inlined_call_operand.vmem [shape: f32[8,128], index: 2, kind: input, shape index: {}]
  %s3 = inlined_call_operand.vmem [shape: f32[128,128], index: 3, kind: input, shape index: {}]
  %s4 = inlined_call_operand.vmem [shape: f32[1,128], index: 4, kind: input, shape index: {}]
  %s5 = inlined_call_operand.vmem [shape: f32[128,1], index: 5, kind: input, shape index: {}]
  %s6 = inlined_call_operand.vmem [shape: f32[8,128], index: 6, kind: output, shape index: {0}]
  %s7 = inlined_call_operand.vmem [shape: f32[8,128], index: 7, kind: output, shape index: {1}]
  %8 = xla_tuple %s6, %s7
  %s9 = sld [smem:[#allocation0]]
  $region42: #{net4_forward.4} parent=0
    _
  %s11 = ssub.s32 1, %s9
  %s12 = scalar_select 0, %s11, %s9
  // Predicated region
  $region2: #{net4_forward.4} parent=0 // pred_check
    _
  $region3: #{net4_forward.4} parent=0 // pred_check_branch
    %14 = sbr.rel (0) target = $region5
  $region4: #{net4_forward.4} parent=0 // pred_region
    _
  $region5: #{net4_forward.4} parent=0 // pred_fallthru
    _
  // Predicated region
  $region6: #{net4_forward.4} parent=0 // pred_check
    _
  $region7: #{net4_forward.4} parent=0 // pred_check_branch
    %16 = sbr.rel (0) target = $region9
  $region8: #{net4_forward.4} parent=0 // pred_region
    _
  $region9: #{net4_forward.4} parent=0 // pred_fallthru
    _
  // Predicated region
  $region10: #{net4_forward.4} parent=0 // pred_check
    _
  $region11: #{net4_forward.4} parent=0 // pred_check_branch
    %18 = sbr.rel (0) target = $region13
  $region12: #{net4_forward.4} parent=0 // pred_region
    _
  $region13: #{net4_forward.4} parent=0 // pred_fallthru
    _
  // Predicated region
  $region14: #{net4_forward.4} parent=0 // pred_check
    _
  $region15: #{net4_forward.4} parent=0 // pred_check_branch
    %20 = sbr.rel (0) target = $region17
  $region16: #{net4_forward.4} parent=0 // pred_region
    _
  $region17: #{net4_forward.4} parent=0 // pred_fallthru
    _
  // Predicated region
  $region18: #{net4_forward.4} parent=0 // pred_check
    _
  $region19: #{net4_forward.4} parent=0 // pred_check_branch
    %22 = sbr.rel (0) target = $region21
  $region20: #{net4_forward.4} parent=0 // pred_region
    _
  $region21: #{net4_forward.4} parent=0 // pred_fallthru
    _
  // Predicated region
  $region22: #{net4_forward.4} parent=0 // pred_check
    _
  $region23: #{net4_forward.4} parent=0 // pred_check_branch
    %24 = sbr.rel (0) target = $region25
  $region24: #{net4_forward.4} parent=0 // pred_region
    _
  $region25: #{net4_forward.4} parent=0 // pred_fallthru
    _
  %v25 = vld [vmem:[%s1] sm:$0xff]
  %v26 = vld [vmem:[%s2] sm:$0xff]
  %v27 = vmul.f32 %v25, %v26
  %v28 = vld [vmem:[%s0] sm:$0xff]
  %v29 = vld [vmem:[%s3] sm:$0xff]
  %v30 = vld [vmem:[%s3 + $0x8] sm:$0xff]
  %v31 = vld [vmem:[%s3 + $0x10] sm:$0xff]
  %v32 = vld [vmem:[%s3 + $0x18] sm:$0xff]
  %v33 = vld [vmem:[%s3 + $0x20] sm:$0xff]
  %v34 = vld [vmem:[%s3 + $0x28] sm:$0xff]
  %v35 = vld [vmem:[%s3 + $0x30] sm:$0xff]
  %v36 = vld [vmem:[%s3 + $0x38] sm:$0xff]
  %v37 = vld [vmem:[%s3 + $0x40] sm:$0xff]
  %v38 = vld [vmem:[%s3 + $0x48] sm:$0xff]
  %v39 = vld [vmem:[%s3 + $0x50] sm:$0xff]
  %v40 = vld [vmem:[%s3 + $0x58] sm:$0xff]
  %v41 = vld [vmem:[%s3 + $0x60] sm:$0xff]
  %v42 = vld [vmem:[%s3 + $0x68] sm:$0xff]
  %v43 = vld [vmem:[%s3 + $0x70] sm:$0xff]
  %v44 = vld [vmem:[%s3 + $0x78] sm:$0xff]
  %v45 = vld [vmem:[%s4] sm:$0x1]
  %v46 = vlaneseq
  %v47 = vshrl.u32 %v46, 7
  %v48 = vlaneseq
  %v49 = vand.u32 %v48, 127
  %vm50 = vcmp.eq.s32.totalorder %v47, %v49
  %v51 = vsel %vm50, 1.0, 0.0
  %v52 = vadd.f32 %v28, %v51
  %vm53 = vcmask 64512
  %v54 = vsel %vm53, %v52, 0.0
  %55 = vadd.xlane.f32.xlu0 %v54
  %v56 = vpop.xlane.xlu0 %55
  %vm57 = vcmp.gt.f32.partialorder %v56, 0.0
  %v58 = vrsqrt.pop %v56
  %v59 = vsel %vm57, %v58, 0.0
  %60 = vmatprep.subr.mxu0 0.0
  %61 = vmatpush1.msra.mxu0 %v44
  %62 = vmatprep.subr.mxu0 0.0
  %63 = vmatpush1.msra.mxu0 %v43
  %64 = vmatprep.subr.mxu0 0.0
  %65 = vmatpush1.msra.mxu0 %v42
  %66 = vmatprep.subr.mxu0 0.0
  %67 = vmatpush1.msra.mxu0 %v41
  %68 = vmatprep.subr.mxu0 0.0
  %69 = vmatpush1.msra.mxu0 %v40
  %70 = vmatprep.subr.mxu0 0.0
  %71 = vmatpush1.msra.mxu0 %v39
  %72 = vmatprep.subr.mxu0 0.0
  %73 = vmatpush1.msra.mxu0 %v38
  %74 = vmatprep.subr.mxu0 0.0
  %75 = vmatpush1.msra.mxu0 %v37
  %76 = vmatprep.subr.mxu0 0.0
  %77 = vmatpush1.msra.mxu0 %v36
  %78 = vmatprep.subr.mxu0 0.0
  %79 = vmatpush1.msra.mxu0 %v35
  %80 = vmatprep.subr.mxu0 0.0
  %81 = vmatpush1.msra.mxu0 %v34
  %82 = vmatprep.subr.mxu0 0.0
  %83 = vmatpush1.msra.mxu0 %v33
  %84 = vmatprep.subr.mxu0 0.0
  %85 = vmatpush1.msra.mxu0 %v32
  %86 = vmatprep.subr.mxu0 0.0
  %87 = vmatpush1.msra.mxu0 %v31
  %88 = vmatprep.subr.mxu0 0.0
  %89 = vmatpush1.msra.mxu0 %v30
  %90 = vmatprep.subr.mxu0 0.0
  %91 = vmatpush1.msra.mxu0 %v29
  %92 = vmatprep.subr.mxu0 0.0
  %93 = vmatpush2.msra.mxu0 0.0
  %94 = vmatprep.subr.mxu0 0.0
  %95 = vmatpush2.msra.mxu0 0.0
  %96 = vmatprep.subr.mxu0 0.0
  %97 = vmatpush2.msra.mxu0 0.0
  %98 = vmatprep.subr.mxu0 0.0
  %99 = vmatpush2.msra.mxu0 0.0
  %100 = vmatprep.subr.mxu0 0.0
  %101 = vmatpush2.msra.mxu0 0.0
  %102 = vmatprep.subr.mxu0 0.0
  %103 = vmatpush2.msra.mxu0 0.0
  %104 = vmatprep.subr.mxu0 0.0
  %105 = vmatpush2.msra.mxu0 0.0
  %106 = vmatprep.subr.mxu0 0.0
  %107 = vmatpush2.msra.mxu0 0.0
  %108 = vmatprep.subr.mxu0 0.0
  %109 = vmatpush2.msra.mxu0 0.0
  %110 = vmatprep.subr.mxu0 0.0
  %111 = vmatpush2.msra.mxu0 0.0
  %112 = vmatprep.subr.mxu0 0.0
  %113 = vmatpush2.msra.mxu0 0.0
  %114 = vmatprep.subr.mxu0 0.0
  %115 = vmatpush2.msra.mxu0 0.0
  %116 = vmatprep.subr.mxu0 0.0
  %117 = vmatpush2.msra.mxu0 0.0
  %118 = vmatprep.subr.mxu0 0.0
  %119 = vmatpush2.msra.mxu0 0.0
  %120 = vmatprep.subr.mxu0 0.0
  %121 = vmatpush2.msra.mxu0 0.0
  %122 = vmatprep.subr.mxu0 0.0
  %123 = vmatpush2.msra.mxu0 0.0
  %124 = vmatprep.mubr.f32.mxu0 0.0
  %125 = vmatmul.mubr.f32.gmra.mxu0 %v27
  %v126 = vpop.f32.mrf.mxu0
  %v127 = vadd.f32 0.0, %v126
  %v128 = vpop.f32.mrf.mxu0
  %129 = vdwg.mxu0
  %v130 = vmul.f32 %v59, %v127
  %v132 = vsel %vm53, %v52, 0
  %134 = vmatprep.subr.mxu0 0.0
  %135 = vmatpush1.msra.mxu0 0.0
  %136 = vmatprep.subr.mxu0 0.0
  %137 = vmatpush1.msra.mxu0 0.0
  %138 = vmatprep.subr.mxu0 0.0
  %139 = vmatpush1.msra.mxu0 0.0
  %140 = vmatprep.subr.mxu0 0.0
  %141 = vmatpush1.msra.mxu0 0.0
  %142 = vmatprep.subr.mxu0 0.0
  %143 = vmatpush1.msra.mxu0 0.0
  %144 = vmatprep.subr.mxu0 0.0
  %145 = vmatpush1.msra.mxu0 0.0
  %146 = vmatprep.subr.mxu0 0.0
  %147 = vmatpush1.msra.mxu0 0.0
  %148 = vmatprep.subr.mxu0 0.0
  %149 = vmatpush1.msra.mxu0 0.0
  %150 = vmatprep.subr.mxu0 0.0
  %151 = vmatpush1.msra.mxu0 0.0
  %152 = vmatprep.subr.mxu0 0.0
  %153 = vmatpush1.msra.mxu0 0.0
  %154 = vmatprep.subr.mxu0 0.0
  %155 = vmatpush1.msra.mxu0 0.0
  %156 = vmatprep.subr.mxu0 0.0
  %157 = vmatpush1.msra.mxu0 0.0
  %158 = vmatprep.subr.mxu0 0.0
  %159 = vmatpush1.msra.mxu0 0.0
  %160 = vmatprep.subr.mxu0 0.0
  %161 = vmatpush1.msra.mxu0 0.0
  %162 = vmatprep.subr.mxu0 0.0
  %163 = vmatpush1.msra.mxu0 0.0
  %164 = vmatprep.subr.mxu0 0.0
  %165 = vmatpush1.msra.mxu0 %v130
  %166 = vmatprep.subr.mxu0 0.0
  %167 = vmatpush2.msra.mxu0 0.0
  %168 = vmatprep.subr.mxu0 0.0
  %169 = vmatpush2.msra.mxu0 0.0
  %170 = vmatprep.subr.mxu0 0.0
  %171 = vmatpush2.msra.mxu0 0.0
  %172 = vmatprep.subr.mxu0 0.0
  %173 = vmatpush2.msra.mxu0 0.0
  %174 = vmatprep.subr.mxu0 0.0
  %175 = vmatpush2.msra.mxu0 0.0
  %176 = vmatprep.subr.mxu0 0.0
  %177 = vmatpush2.msra.mxu0 0.0
  %178 = vmatprep.subr.mxu0 0.0
  %179 = vmatpush2.msra.mxu0 0.0
  %180 = vmatprep.subr.mxu0 0.0
  %181 = vmatpush2.msra.mxu0 0.0
  %182 = vmatprep.subr.mxu0 0.0
  %183 = vmatpush2.msra.mxu0 0.0
  %184 = vmatprep.subr.mxu0 0.0
  %185 = vmatpush2.msra.mxu0 0.0
  %186 = vmatprep.subr.mxu0 0.0
  %187 = vmatpush2.msra.mxu0 0.0
  %188 = vmatprep.subr.mxu0 0.0
  %189 = vmatpush2.msra.mxu0 0.0
  %190 = vmatprep.subr.mxu0 0.0
  %191 = vmatpush2.msra.mxu0 0.0
  %192 = vmatprep.subr.mxu0 0.0
  %193 = vmatpush2.msra.mxu0 0.0
  %194 = vmatprep.subr.mxu0 0.0
  %195 = vmatpush2.msra.mxu0 0.0
  %196 = vmatprep.subr.mxu0 0.0
  %197 = vmatpush2.msra.mxu0 0.0
  %198 = vmatprep.mubr.f32.mxu0 0.0
  %199 = vmatmul.mubr.f32.gmra.mxu0 %v132
  %v200 = vpop.f32.mrf.mxu0
  %v201 = vadd.f32 0.0, %v200
  %v202 = vpop.f32.mrf.mxu0
  %203 = vdwg.mxu0
  %v204 = vmul.f32 %v59, %v201
  %v206 = vlaneseq
  %v207 = vshrl.u32 %v206, 7
  %v208 = vsub.s32 0, %v207
  %v209 = vrot.slane %v45, %v208
  %v211 = vadd.f32 %v204, %v209
  %v212 = vmax.f32 %v211, 0.0
  %213 = vst [vmem:[%s6] sm:$0xff] %v212
  %v214 = vld [vmem:[%s5] sm:$0xff]
  %v215 = vld [vmem:[%s5 + $0x8] sm:$0xff]
  %v216 = vld [vmem:[%s5 + $0x10] sm:$0xff]
  %v217 = vld [vmem:[%s5 + $0x18] sm:$0xff]
  %v218 = vld [vmem:[%s5 + $0x20] sm:$0xff]
  %v219 = vld [vmem:[%s5 + $0x28] sm:$0xff]
  %v220 = vld [vmem:[%s5 + $0x30] sm:$0xff]
  %v221 = vld [vmem:[%s5 + $0x38] sm:$0xff]
  %v222 = vld [vmem:[%s5 + $0x40] sm:$0xff]
  %v223 = vld [vmem:[%s5 + $0x48] sm:$0xff]
  %v224 = vld [vmem:[%s5 + $0x50] sm:$0xff]
  %v225 = vld [vmem:[%s5 + $0x58] sm:$0xff]
  %v226 = vld [vmem:[%s5 + $0x60] sm:$0xff]
  %v227 = vld [vmem:[%s5 + $0x68] sm:$0xff]
  %v228 = vld [vmem:[%s5 + $0x70] sm:$0xff]
  %v229 = vld [vmem:[%s5 + $0x78] sm:$0xff]
  %230 = vmatprep.subr.mxu0 0.0
  %231 = vmatpush1.msra.mxu0 %v229
  %232 = vmatprep.subr.mxu0 0.0
  %233 = vmatpush1.msra.mxu0 %v228
  %234 = vmatprep.subr.mxu0 0.0
  %235 = vmatpush1.msra.mxu0 %v227
  %236 = vmatprep.subr.mxu0 0.0
  %237 = vmatpush1.msra.mxu0 %v226
  %238 = vmatprep.subr.mxu0 0.0
  %239 = vmatpush1.msra.mxu0 %v225
  %240 = vmatprep.subr.mxu0 0.0
  %241 = vmatpush1.msra.mxu0 %v224
  %242 = vmatprep.subr.mxu0 0.0
  %243 = vmatpush1.msra.mxu0 %v223
  %244 = vmatprep.subr.mxu0 0.0
  %245 = vmatpush1.msra.mxu0 %v222
  %246 = vmatprep.subr.mxu0 0.0
  %247 = vmatpush1.msra.mxu0 %v221
  %248 = vmatprep.subr.mxu0 0.0
  %249 = vmatpush1.msra.mxu0 %v220
  %250 = vmatprep.subr.mxu0 0.0
  %251 = vmatpush1.msra.mxu0 %v219
  %252 = vmatprep.subr.mxu0 0.0
  %253 = vmatpush1.msra.mxu0 %v218
  %254 = vmatprep.subr.mxu0 0.0
  %255 = vmatpush1.msra.mxu0 %v217
  %256 = vmatprep.subr.mxu0 0.0
  %257 = vmatpush1.msra.mxu0 %v216
  %258 = vmatprep.subr.mxu0 0.0
  %259 = vmatpush1.msra.mxu0 %v215
  %260 = vmatprep.subr.mxu0 0.0
  %261 = vmatpush1.msra.mxu0 %v214
  %262 = vmatprep.subr.mxu0 0.0
  %263 = vmatpush2.msra.mxu0 0.0
  %264 = vmatprep.subr.mxu0 0.0
  %265 = vmatpush2.msra.mxu0 0.0
  %266 = vmatprep.subr.mxu0 0.0
  %267 = vmatpush2.msra.mxu0 0.0
  %268 = vmatprep.subr.mxu0 0.0
  %269 = vmatpush2.msra.mxu0 0.0
  %270 = vmatprep.subr.mxu0 0.0
  %271 = vmatpush2.msra.mxu0 0.0
  %272 = vmatprep.subr.mxu0 0.0
  %273 = vmatpush2.msra.mxu0 0.0
  %274 = vmatprep.subr.mxu0 0.0
  %275 = vmatpush2.msra.mxu0 0.0
  %276 = vmatprep.subr.mxu0 0.0
  %277 = vmatpush2.msra.mxu0 0.0
  %278 = vmatprep.subr.mxu0 0.0
  %279 = vmatpush2.msra.mxu0 0.0
  %280 = vmatprep.subr.mxu0 0.0
  %281 = vmatpush2.msra.mxu0 0.0
  %282 = vmatprep.subr.mxu0 0.0
  %283 = vmatpush2.msra.mxu0 0.0
  %284 = vmatprep.subr.mxu0 0.0
  %285 = vmatpush2.msra.mxu0 0.0
  %286 = vmatprep.subr.mxu0 0.0
  %287 = vmatpush2.msra.mxu0 0.0
  %288 = vmatprep.subr.mxu0 0.0
  %289 = vmatpush2.msra.mxu0 0.0
  %290 = vmatprep.subr.mxu0 0.0
  %291 = vmatpush2.msra.mxu0 0.0
  %292 = vmatprep.subr.mxu0 0.0
  %293 = vmatpush2.msra.mxu0 0.0
  %294 = vmatprep.mubr.f32.mxu0 0.0
  %295 = vmatmul.mubr.f32.gmra.mxu0 %v212
  %v296 = vpop.f32.mrf.mxu0
  %v297 = vadd.f32 0.0, %v296
  %v298 = vpop.f32.mrf.mxu0
  %299 = vdwg.mxu0
  %v300 = vtanh.pop %v297
  %302 = vset.pattern.permute.xlu0 0
  %303 = vperm.xlu0 %302, %v300
  %v304 = vpop.permute.xlu0 %303
  %306 = vst [vmem:[%s7] sm:$0xff] %v304
  // Predicated region
  $region26: #{net4_forward.4} parent=0 // pred_check
    _
  $region27: #{net4_forward.4} parent=0 // pred_check_branch
    %308 = sbr.rel (0) target = $region29
  $region28: #{net4_forward.4} parent=0 // pred_region
    _
  $region29: #{net4_forward.4} parent=0 // pred_fallthru
    _
  // Predicated region
  $region30: #{net4_forward.4} parent=0 // pred_check
    _
  $region31: #{net4_forward.4} parent=0 // pred_check_branch
    %310 = sbr.rel (0) target = $region33
  $region32: #{net4_forward.4} parent=0 // pred_region
    _
  $region33: #{net4_forward.4} parent=0 // pred_fallthru
    _
  // Predicated region
  $region34: #{net4_forward.4} parent=0 // pred_check
    _
  $region35: #{net4_forward.4} parent=0 // pred_check_branch
    %312 = sbr.rel (0) target = $region37
  $region36: #{net4_forward.4} parent=0 // pred_region
    _
  $region37: #{net4_forward.4} parent=0 // pred_fallthru
    _
  // Predicated region
  $region38: #{net4_forward.4} parent=0 // pred_check
    _
  $region39: #{net4_forward.4} parent=0 // pred_check_branch
    %314 = sbr.rel (0) target = $region41
  $region40: #{net4_forward.4} parent=0 // pred_region
    _
  $region41: #{net4_forward.4} parent=0 // pred_fallthru
    _

// kernel: net4_forward.5
$region0: #{net4_forward.5}
  #allocation0 [shape = 'u32[]', space=smem, size = 0x4, offset = 0x4, fixed_abs, tag = 'smem constant byte address 0x4 - core index']
  #allocation1 [shape = 'u32[144,128]{1,0:T(1,128)}', space=vmem, size = 0x12000, scoped, tag = 'internal scratch']
  %s0 = inlined_call_operand.vmem [shape: f32[4,128], index: 0, kind: input, shape index: {}]
  %s1 = inlined_call_operand.vmem [shape: f32[4,128], index: 1, kind: input, shape index: {}]
  %s2 = inlined_call_operand.hbm [shape: f32[4,128], index: 2, kind: output, shape index: {}]
  %s3 = sld [smem:[#allocation0]]
  $region18: #{net4_forward.5} parent=0
    _
  %s5 = ssub.s32 1, %s3
  %s6 = scalar_select 0, %s5, %s3
  $region1: #{net4_forward.5} parent=0
    #allocation2 [shape = 'u8[2048]{0}', space=vmem, size = 0x800, scoped, tag = 'output window, operand 0, single buffered']
    #allocation3 [shape = 's32[1]{0}', space=sflag, size = 0x4, scoped, tag = 'scoped memory for net4_forward.5']
    %7 = vsyncpa [#allocation3], 0
    // Predicated region
    $region2: #{net4_forward.5} parent=1 // pred_check
      _
    $region3: #{net4_forward.5} parent=1 // pred_check_branch
      %9 = sbr.rel (0) target = $region5
    $region4: #{net4_forward.5} parent=1 // pred_region
      _
    $region5: #{net4_forward.5} parent=1 // pred_fallthru
      _
    // Predicated region
    $region6: #{net4_forward.5} parent=1 // pred_check
      _
    $region7: #{net4_forward.5} parent=1 // pred_check_branch
      %11 = sbr.rel (0) target = $region9
    $region8: #{net4_forward.5} parent=1 // pred_region
      _
    $region9: #{net4_forward.5} parent=1 // pred_fallthru
      _
    %v12 = vld [vmem:[%s0] sm:$0xf]
    %v13 = vld [vmem:[%s1] sm:$0xf]
    %v14 = vmul.f32 %v12, %v13
    %v15 = vlaneseq
    %v16 = vand.u32 %v15, 127
    %vm17 = vcmp.lt.s32.totalorder %v16, 62
    %v18 = vsel %vm17, %v14, -inf
    %vm19 = vcmask 1043456
    %v20 = vsel %vm19, %v18, -inf
    %21 = vmax.xlane.f32.xlu0 %v20
    %v22 = vpop.xlane.xlu0 %21
    %v23 = vsub.f32 %v18, %v22
    %v24 = vmul.f32 %v23, 1.442695
    %v25 = vpow.pop %v24
    %v26 = vsel %vm19, %v25, 0.0
    %27 = vadd.xlane.f32.xlu0 %v26
    %v28 = vpop.xlane.xlu0 %27
    %v29 = vlog2.pop %v28
    %v30 = vmul.f32 %v29, 0.6931472
    %v31 = vadd.f32 %v30, %v22
    %v32 = vsub.f32 %v18, %v31
    %33 = vst [vmem:[#allocation2] sm:$0xf] %v32
    // Predicated region
    $region10: #{net4_forward.5} parent=1 // pred_check
      _
    $region11: #{net4_forward.5} parent=1 // pred_check_branch
      %35 = sbr.rel (0) target = $region13
    $region12: #{net4_forward.5} parent=1 // pred_region
      %s37 = ssub.s32 64, 64
      %38 = vsyncadd [#allocation3], %s37
      %s40 = sshll.u32 [#allocation2], 4
      %s41 = int_to_ptr.vmem [resolvable:$true] %s40
      %43 = dma.vmem_to_hbm [thread:$0]  %s41, 64, %s2, [#allocation3]
    $region13: #{net4_forward.5} parent=1 // pred_fallthru
      _
    // Predicated region
    $region14: #{net4_forward.5} parent=1 // pred_check
      _
    $region15: #{net4_forward.5} parent=1 // pred_check_branch
      %45 = sbr.rel (0) target = $region17
    $region16: #{net4_forward.5} parent=1 // pred_region
      %46 = dma.done [#allocation3], 64
    $region17: #{net4_forward.5} parent=1 // pred_fallthru
      _
    %47 = vsyncpa [#allocation3], 1

</llo_original>
